<compile_context>
chip_gen: v7x
topology: tpu7x:2x2x1
jax: 0.10.0
libtpu: 0.0.40
codegen_flags: <defaults>
</compile_context>

<pallas_src>
import jax
import jax.numpy as jnp
from jax.experimental import pallas as pl
from jax.experimental.pallas import tpu as pltpu


def _add_pos_kernel(x_ref, pos_ref, o_ref):
    # x_ref / o_ref: (BT, N) lane-dense slab of BT batch rows (N = S*D).
    # pos_ref:       (1, N) positional row, VMEM-resident (constant index_map).
    # Index row 0 explicitly (avoids a per-step (1,N)->(BT,N) broadcast view).
    o_ref[...] = x_ref[...] + pos_ref[0]


def _default_block_bytes():
    # Bigger slabs on v7x: at 3.2 TB/s a 4 MiB step is only ~2.5 us of traffic,
    # so the ~0.35 us per-step overhead is ~14%; 8 MiB halves that. v5e/v6e
    # steps are 5-10 us at 4 MiB already, so keep 4 MiB there (and spare VMEM).
    try:
        kind = jax.devices()[0].device_kind.lower()
        if "v7" in kind:
            return 8 << 20
    except Exception:  # device query is best-effort only
        pass
    return 4 << 20


def _choose_bt(B, row_bytes, itemsize, target_block_bytes, min_steps=4):
    """Batch rows per grid step: sublane-aligned, ideally a divisor of B,
    sized for ~target_block_bytes slabs and for >= min_steps grid steps."""
    sublane_mult = max(8, 32 // itemsize)  # 8 for f32, 16 for bf16, 32 for int8
    if B <= sublane_mult:
        return B  # block dim == full batch dim -> always legal
    max_rows = min(
        max(sublane_mult, target_block_bytes // row_bytes),  # slab / VMEM target
        max(sublane_mult, B // min_steps),                    # keep pipeline busy
        (B // sublane_mult) * sublane_mult,                   # stay <= aligned B
    )
    max_rows = max(sublane_mult, (max_rows // sublane_mult) * sublane_mult)
    # Prefer sublane-aligned divisors of B (no masked tail block); among those,
    # prefer one giving an even step count (balanced 2-TC split on v7x).
    best_divisor = None
    for cand in range(max_rows, sublane_mult - 1, -sublane_mult):
        if B % cand == 0:
            if best_divisor is None:
                best_divisor = cand
            if (B // cand) % 2 == 0:
                return cand
    return best_divisor if best_divisor is not None else max_rows


def learned_positional_encoding(x, pos_enc, *, use_pallas=None,
                                target_block_bytes=None, donate_x=False):
    """Forward of LearnedPositionalEncoding: x + pos_enc[:, :x.shape[1], :].

    x: (B, S, D); pos_enc: (1, num_patches + 1, D).
    """
    B, S, D = x.shape
    assert S <= pos_enc.shape[1], (
        f"sequence length {S} exceeds positional table {pos_enc.shape[1]}")

    # Match PyTorch type promotion (bf16 x + f32 pos -> f32 output, etc.).
    out_dtype = jnp.result_type(x.dtype, pos_enc.dtype)
    pos = pos_enc[:, :S, :].astype(out_dtype)
    x = x.astype(out_dtype)

    if target_block_bytes is None:
        target_block_bytes = _default_block_bytes()

    itemsize = jnp.dtype(out_dtype).itemsize
    total_bytes = B * S * D * itemsize
    if use_pallas is None:
        # Below ~2 slabs the Pallas grid degenerates to 1-2 unpipelined steps
        # while XLA's fused broadcast-add is already at roofline.
        use_pallas = total_bytes >= 2 * target_block_bytes
    if not use_pallas:
        return x + pos

    # Lane-dense layout: last dim = S*D (full array dim -> always legal).
    N = S * D
    x2 = x.reshape(B, N)
    pos2 = pos.reshape(1, N)

    row_bytes = N * itemsize
    # TODO(synk): if a single (1, S*D) row ever exceeded the VMEM budget we
    # would additionally tile the N axis; ViT rows are well under 1 MiB.
    BT = _choose_bt(B, row_bytes, itemsize, target_block_bytes)
    grid = (pl.cdiv(B, BT),)

    # VMEM budget: double-buffered x + out slabs + resident pos + headroom.
    block_bytes = BT * row_bytes
    vmem_need = 4 * block_bytes + 2 * row_bytes + (2 << 20)
    vmem_limit = int(min(max(vmem_need, 16 << 20), 48 << 20))

    out2 = pl.pallas_call(
        _add_pos_kernel,
        out_shape=jax.ShapeDtypeStruct((B, N), out_dtype),
        grid_spec=pltpu.PrefetchScalarGridSpec(
            num_scalar_prefetch=0,
            grid=grid,
            in_specs=[
                pl.BlockSpec((BT, N), lambda b: (b, 0)),  # x: BT-row slab per step
                pl.BlockSpec((1, N), lambda b: (0, 0)),   # pos: constant -> resident
            ],
            out_specs=pl.BlockSpec((BT, N), lambda b: (b, 0)),
        ),
        compiler_params=pltpu.CompilerParams(
            dimension_semantics=("parallel",),
            vmem_limit_bytes=vmem_limit,
        ),
        # Optional in-place update when the caller can donate x (halves HBM
        # footprint; no bandwidth change for this read+write-bound op).
        input_output_aliases=({0: 0} if donate_x else {}),
    )(x2, pos2)

    return out2.reshape(B, S, D)


def init_positional_encoding(key, num_patches, embedding_dim, std=0.02):
    # Matches nn.init.trunc_normal_(std=0.02): normal truncated to +/- 2 std.
    return std * jax.random.truncated_normal(
        key, -2.0, 2.0, (1, num_patches + 1, embedding_dim), dtype=jnp.float32)


if __name__ == "__main__":
    key = jax.random.PRNGKey(0)
    k_x, k_pos, k_x2, k_pos2 = jax.random.split(key, 4)

    # --- small shape consistent with the module (B=2, S=8, D=32) -------------
    B, S, D = 2, 8, 32
    num_patches = 16                      # table covers num_patches + 1 = 17 rows
    x = jax.random.normal(k_x, (B, S, D), dtype=jnp.float32)
    pos_enc = init_positional_encoding(k_pos, num_patches, D)

    ref = x + pos_enc[:, :S, :]
    # Force the Pallas path so the kernel itself is exercised even at toy size.
    out = jax.block_until_ready(
        learned_positional_encoding(x, pos_enc, use_pallas=True))
    assert out.shape == (B, S, D)
    assert out.dtype == ref.dtype
    assert jnp.allclose(out, ref, atol=1e-6), "pallas path mismatch vs reference"

    # Auto path (routes this tiny input to the fused XLA add) must agree too.
    out_auto = jax.block_until_ready(learned_positional_encoding(x, pos_enc))
    assert jnp.allclose(out_auto, ref, atol=1e-6), "fallback mismatch vs reference"

    # --- larger shape to exercise sublane-aligned BT + multi-step grid -------
    B2, S2, D2 = 32, 64, 128              # ~1 MiB f32; BT=8 -> 4 grid steps
    x_big = jax.random.normal(k_x2, (B2, S2, D2), dtype=jnp.float32)
    pos_big = init_positional_encoding(k_pos2, S2, D2)
    ref_big = x_big + pos_big[:, :S2, :]
    out_big = jax.block_until_ready(
        learned_positional_encoding(x_big, pos_big, use_pallas=True))
    assert jnp.allclose(out_big, ref_big, atol=1e-6), "tiled path mismatch"

    print("KERNEL_OK")
</pallas_src>

<mosaic_0001>
module attributes {stable_mosaic.version = 11 : i64} {
  func.func @_add_pos_kernel(%arg0: i32, %arg1: memref<2x256xf32, #tpu.memory_space<vmem>>, %arg2: memref<1x256xf32, #tpu.memory_space<vmem>>, %arg3: memref<2x256xf32, #tpu.memory_space<vmem>>) attributes {dimension_semantics = [#tpu.dimension_semantics<parallel>], iteration_bounds = array<i64: 1>, scalar_prefetch = 0 : i64, scratch_operands = 0 : i64, tpu.core_type = #tpu.core_type<tc>, window_params = [{transform_indices = @transform_0, window_bounds = array<i64: 2, 256>}, {pipeline_mode = #tpu.pipeline_mode<synchronous>, transform_indices = @transform_1, window_bounds = array<i64: 1, 256>}, {transform_indices = @transform_2, window_bounds = array<i64: 2, 256>}]} {
    %c0 = arith.constant 0 : index
    %c0_0 = arith.constant 0 : index
    %0 = vector.load %arg1[%c0, %c0_0] : memref<2x256xf32, #tpu.memory_space<vmem>>, vector<2x256xf32>
    %c0_1 = arith.constant 0 : index
    %c0_2 = arith.constant 0 : index
    %1 = vector.load %arg2[%c0_1, %c0_2] : memref<1x256xf32, #tpu.memory_space<vmem>>, vector<1x256xf32>
    %2 = vector.shape_cast %1 : vector<1x256xf32> to vector<256xf32>
    %3 = vector.shape_cast %2 : vector<256xf32> to vector<1x256xf32>
    %4 = vector.broadcast %3 : vector<1x256xf32> to vector<2x256xf32>
    %5 = arith.addf %0, %4 : vector<2x256xf32>
    %c0_3 = arith.constant 0 : index
    %c0_4 = arith.constant 0 : index
    %6 = vector.load %arg3[%c0_3, %c0_4] : memref<2x256xf32, #tpu.memory_space<vmem>>, vector<2x256xf32>
    tpu.vector_store %arg3[%c0_3, %c0_4], %5 {strides = array<i32>} : memref<2x256xf32, #tpu.memory_space<vmem>>, vector<2x256xf32>,
    return
  }
  func.func @transform_0(%arg0: i32) -> (i32, i32) {
    %c0_i32 = arith.constant 0 : i32
    %c0_i32_0 = arith.constant 0 : i32
    return %arg0, %c0_i32 : i32, i32
  }
  func.func @transform_1(%arg0: i32) -> (i32, i32) {
    %c0_i32 = arith.constant 0 : i32
    %c0_i32_0 = arith.constant 0 : i32
    %c0_i32_1 = arith.constant 0 : i32
    return %c0_i32, %c0_i32_0 : i32, i32
  }
  func.func @transform_2(%arg0: i32) -> (i32, i32) {
    %c0_i32 = arith.constant 0 : i32
    %c0_i32_0 = arith.constant 0 : i32
    return %arg0, %c0_i32 : i32, i32
  }
}

</mosaic_0001>

<llo_original>
// kernel: tpu_custom_call.1
$region0: #{tpu_custom_call.1}
  #allocation0 [shape = 'u32[]', space=smem, size = 0x4, offset = 0x4, fixed_abs, tag = 'smem constant byte address 0x4 - core index']
  #allocation1 [shape = 'u32[144,128]{1,0:T(1,128)}', space=vmem, size = 0x12000, scoped, tag = 'internal scratch']
  %s0 = inlined_call_operand.hbm [shape: f32[2,256], index: 0, kind: input, shape index: {}]
  %s1 = inlined_call_operand.vmem [shape: f32[1,256], index: 1, kind: input, shape index: {}]
  %s2 = inlined_call_operand.hbm [shape: f32[2,256], index: 2, kind: output, shape index: {}]
  %s3 = sld [smem:[#allocation0]]
  $region22: #{tpu_custom_call.1} parent=0
    _
  %s5 = ssub.s32 1, %s3
  %s6 = scalar_select 0, %s5, %s3
  $region1: #{tpu_custom_call.1} parent=0
    #allocation2 [shape = 'u8[2048]{0}', space=vmem, size = 0x800, scoped, tag = 'input window, operand 0, single buffered']
    #allocation3 [shape = 's32[1]{0}', space=sflag, size = 0x4, scoped, tag = 'scoped memory for tpu_custom_call.1']
    #allocation4 [shape = 's32[1]{0}', space=sflag, size = 0x4, scoped, tag = 'scoped memory for tpu_custom_call.1']
    #allocation5 [shape = 'u8[2048]{0}', space=vmem, size = 0x800, scoped, tag = 'output window, operand 0, single buffered']
    %7 = vsyncpa [#allocation3], 0
    %8 = vsyncpa [#allocation4], 0
    // Predicated region
    $region2: #{tpu_custom_call.1} parent=1 // pred_check
      _
    $region3: #{tpu_custom_call.1} parent=1 // pred_check_branch
      %10 = sbr.rel (0) target = $region5
    $region4: #{tpu_custom_call.1} parent=1 // pred_region
      %s12 = ssub.s32 64, 64
      %13 = vsyncadd [#allocation3], %s12
      %s15 = sshll.u32 [#allocation2], 4
      %s16 = int_to_ptr.vmem [resolvable:$true] %s15
      %18 = dma.hbm_to_vmem [thread:$0]  %s0, 64, %s16, [#allocation3]
    $region5: #{tpu_custom_call.1} parent=1 // pred_fallthru
      _
    // Predicated region
    $region6: #{tpu_custom_call.1} parent=1 // pred_check
      _
    $region7: #{tpu_custom_call.1} parent=1 // pred_check_branch
      %20 = sbr.rel (0) target = $region9
    $region8: #{tpu_custom_call.1} parent=1 // pred_region
      _
    $region9: #{tpu_custom_call.1} parent=1 // pred_fallthru
      _
    // Predicated region
    $region10: #{tpu_custom_call.1} parent=1 // pred_check
      _
    $region11: #{tpu_custom_call.1} parent=1 // pred_check_branch
      %22 = sbr.rel (0) target = $region13
    $region12: #{tpu_custom_call.1} parent=1 // pred_region
      %23 = dma.done [#allocation3], 64
    $region13: #{tpu_custom_call.1} parent=1 // pred_fallthru
      _
    %v24 = vld [vmem:[#allocation2] sm:$0xf]
    %v25 = vld [vmem:[%s1] sm:$0x3]
    %v27 = vlaneseq
    %v28 = vshrl.u32 %v27, 7
    %v29 = vsub.s32 0, %v28
    %v30 = vrot.slane %v25, %v29
    %v31 = vlaneseq
    %v32 = vshrl.u32 %v31, 7
    %v33 = vsub.s32 1, %v32
    %v34 = vrot.slane %v25, %v33
    %v35 = vcombine.low %v30, %v34
    %v37 = vunpack.c.l.s4 1983009808
    %v38 = vunpack.c.0.s8 %v37
    %v39 = vlaneseq
    %v40 = vshrl.u32 %v39, 7
    %v41 = vsub.s32 %v38, %v40
    %v42 = vrot.slane %v35, %v41
    %v44 = vadd.f32 %v24, %v42
    %45 = vst [vmem:[#allocation5] sm:$0xf] %v44
    // Predicated region
    $region14: #{tpu_custom_call.1} parent=1 // pred_check
      _
    $region15: #{tpu_custom_call.1} parent=1 // pred_check_branch
      %47 = sbr.rel (0) target = $region17
    $region16: #{tpu_custom_call.1} parent=1 // pred_region
      %s49 = ssub.s32 64, 64
      %50 = vsyncadd [#allocation4], %s49
      %s52 = sshll.u32 [#allocation5], 4
      %s53 = int_to_ptr.vmem [resolvable:$true] %s52
      %55 = dma.vmem_to_hbm [thread:$0]  %s53, 64, %s2, [#allocation4]
    $region17: #{tpu_custom_call.1} parent=1 // pred_fallthru
      _
    // Predicated region
    $region18: #{tpu_custom_call.1} parent=1 // pred_check
      _
    $region19: #{tpu_custom_call.1} parent=1 // pred_check_branch
      %57 = sbr.rel (0) target = $region21
    $region20: #{tpu_custom_call.1} parent=1 // pred_region
      %58 = dma.done [#allocation4], 64
    $region21: #{tpu_custom_call.1} parent=1 // pred_fallthru
      _
    %59 = vsyncpa [#allocation3], 1
    %60 = vsyncpa [#allocation4], 1

</llo_original>
